<compile_context>
chip_gen: v6e
topology: v6e:2x2x1
jax: 0.10.0
libtpu: 0.0.40
codegen_flags: <defaults>
</compile_context>

<pallas_src>
import math
import jax
import jax.numpy as jnp
from jax.experimental import pallas as pl
from jax.experimental.pallas import tpu as pltpu


def _lorentz_head_kernel(x_ref, w_ref, b_ref, o_ref):
    # Minkowski sign, the x2 scale and the +2 offset are already folded into
    # w_ref / b_ref by the wrapper: one MXU dot + a VPU bias add.
    acc = jnp.dot(x_ref[...], w_ref[...], preferred_element_type=jnp.float32)
    o_ref[...] = (acc + b_ref[...]).astype(o_ref.dtype)


def lorentz_mlp_head(x, cls_w, bias, *, block_rows=1024):
    """Lorentz MLP head: 2 + 2 * cinner(x, cls) + bias.

    x:      (N, dim)         float32
    cls_w:  (n_classes, dim) float32
    bias:   (n_classes,)     float32
    returns (N, n_classes)   float32
    """
    n, dim = x.shape
    n_classes, _ = cls_w.shape

    # ---- fold sign + affine into the small operands (O(n_classes*dim) work;
    # the large x operand is streamed untouched). ----------------------------
    sign = jnp.concatenate(
        [-jnp.ones((1,), cls_w.dtype), jnp.ones((dim - 1,), cls_w.dtype)])
    w_small = (2.0 * cls_w * sign[None, :]).T            # (dim, n_classes)
    b_small = bias.astype(jnp.float32) + 2.0             # (n_classes,)

    # ---- lane packing ------------------------------------------------------
    pack = max(1, 128 // n_classes)          # fill 128 output lanes
    pack = min(pack, max(1, 2048 // dim))    # cap the packed contraction width
    n_pad = pack * pl.cdiv(n, pack)
    x_in = x if n_pad == n else jnp.pad(x, ((0, n_pad - n), (0, 0)))
    # TODO(synk): the pad above copies x only when N % pack != 0; split off the
    # (< pack)-row tail into a tiny XLA matmul if that copy ever matters.
    n_rows = n_pad // pack                   # packed rows
    k_w = pack * dim                         # packed contraction width
    n_w = pack * n_classes                   # packed output width (<= 128)

    x_packed = x_in.reshape(n_rows, k_w)                       # free reshape
    w_packed = jnp.kron(jnp.eye(pack, dtype=w_small.dtype), w_small)  # (k_w, n_w)
    b_packed = jnp.tile(b_small, pack).reshape(1, n_w)

    # ---- tiling: ragged final block is masked by Pallas (no row padding to
    # the tile, no output slice for the tiled path). -------------------------
    vmem_budget = 8 * 1024 * 1024            # double-buffered x+out tiles, safe on v5e
    max_rows = max(8, (vmem_budget // (2 * 4 * (k_w + n_w))) // 8 * 8)
    tile_rows = min(block_rows, max_rows)
    if tile_rows >= n_rows:
        tile_rows = n_rows                   # single full-array block, no masking
    grid = (pl.cdiv(n_rows, tile_rows),)

    cost = pl.CostEstimate(
        flops=2 * n_rows * k_w * n_w,
        transcendentals=0,
        bytes_accessed=4 * (n_rows * k_w + n_rows * n_w + k_w * n_w + n_w),
    )

    out_packed = pl.pallas_call(
        _lorentz_head_kernel,
        out_shape=jax.ShapeDtypeStruct((n_rows, n_w), jnp.float32),
        grid_spec=pltpu.PrefetchScalarGridSpec(
            num_scalar_prefetch=0,
            grid=grid,
            in_specs=[
                pl.BlockSpec((tile_rows, k_w), lambda i: (i, 0)),   # packed x rows
                pl.BlockSpec((k_w, n_w), lambda i: (0, 0)),         # weight (resident)
                pl.BlockSpec((1, n_w), lambda i: (0, 0)),           # bias (resident)
            ],
            out_specs=pl.BlockSpec((tile_rows, n_w), lambda i: (i, 0)),
        ),
        compiler_params=pltpu.CompilerParams(
            dimension_semantics=("parallel",),   # rows shard across TCs on v7x
        ),
        cost_estimate=cost,
    )(x_packed, w_packed, b_packed)

    out = out_packed.reshape(n_pad, n_classes)   # free reshape
    return out if n_pad == n else out[:n]


def _reference(x, cls_w, bias):
    xl = x.at[:, 0].multiply(-1.0)
    return 2.0 + 2.0 * (xl @ cls_w.T) + bias[None, :]


if __name__ == "__main__":
    key = jax.random.PRNGKey(0)
    kx, kc, kb, kx2 = jax.random.split(key, 4)

    # --- Small case (single full-array block) -------------------------------
    N, DIM, N_CLASSES = 64, 16, 8

    x = jax.random.normal(kx, (N, DIM), dtype=jnp.float32)
    # cls ~ random_normal((n_classes, dim), std=1/sqrt(dim))
    # TODO(synk): manifold.random_normal samples a wrapped normal on the
    # hyperboloid; plain Gaussian with the same std used for synthetic init.
    cls_w = (1.0 / math.sqrt(DIM)) * jax.random.normal(
        kc, (N_CLASSES, DIM), dtype=jnp.float32)
    # Module inits bias to zeros; nonzero here to exercise the bias folding.
    bias = 0.1 * jax.random.normal(kb, (N_CLASSES,), dtype=jnp.float32)

    out = jax.block_until_ready(lorentz_mlp_head(x, cls_w, bias))
    ref = _reference(x, cls_w, bias)
    assert out.shape == (N, N_CLASSES)
    assert jnp.allclose(out, ref, atol=1e-4, rtol=1e-4), "mismatch (small case)"

    # --- Larger case (N not a multiple of pack=16 -> pad + unpack slice) ----
    N2 = 2500
    x2 = jax.random.normal(kx2, (N2, DIM), dtype=jnp.float32)
    out2 = jax.block_until_ready(lorentz_mlp_head(x2, cls_w, bias))
    ref2 = _reference(x2, cls_w, bias)
    assert out2.shape == (N2, N_CLASSES)
    assert jnp.allclose(out2, ref2, atol=1e-4, rtol=1e-4), "mismatch (tiled case)"

    print("KERNEL_OK")
</pallas_src>

<mosaic_0001>
module attributes {stable_mosaic.version = 11 : i64} {
  func.func @_lorentz_head_kernel(%arg0: i32, %arg1: memref<4x256xf32, #tpu.memory_space<vmem>>, %arg2: memref<256x128xf32, #tpu.memory_space<vmem>>, %arg3: memref<1x128xf32, #tpu.memory_space<vmem>>, %arg4: memref<4x128xf32, #tpu.memory_space<vmem>>) attributes {dimension_semantics = [#tpu.dimension_semantics<parallel>], iteration_bounds = array<i64: 1>, scalar_prefetch = 0 : i64, scratch_operands = 0 : i64, tpu.core_type = #tpu.core_type<tc>, window_params = [{transform_indices = @transform_0, window_bounds = array<i64: 4, 256>}, {pipeline_mode = #tpu.pipeline_mode<synchronous>, transform_indices = @transform_1, window_bounds = array<i64: 256, 128>}, {pipeline_mode = #tpu.pipeline_mode<synchronous>, transform_indices = @transform_2, window_bounds = array<i64: 1, 128>}, {transform_indices = @transform_3, window_bounds = array<i64: 4, 128>}]} {
    %c0 = arith.constant 0 : index
    %c0_0 = arith.constant 0 : index
    %0 = vector.load %arg1[%c0, %c0_0] : memref<4x256xf32, #tpu.memory_space<vmem>>, vector<4x256xf32>
    %c0_1 = arith.constant 0 : index
    %c0_2 = arith.constant 0 : index
    %1 = vector.load %arg2[%c0_1, %c0_2] : memref<256x128xf32, #tpu.memory_space<vmem>>, vector<256x128xf32>
    %cst = arith.constant dense<0.000000e+00> : vector<4x128xf32>
    %2 = tpu.matmul %0, %1, %cst {dimension_numbers = #tpu.dot_dimension_numbers<[1], [0], [0], [1], [0, 0, 1, 1], [], []>} : vector<4x256xf32>, vector<256x128xf32>, vector<4x128xf32> -> vector<4x128xf32>
    %c0_3 = arith.constant 0 : index
    %c0_4 = arith.constant 0 : index
    %3 = vector.load %arg3[%c0_3, %c0_4] : memref<1x128xf32, #tpu.memory_space<vmem>>, vector<1x128xf32>
    %4 = vector.broadcast %3 : vector<1x128xf32> to vector<4x128xf32>
    %5 = arith.addf %2, %4 : vector<4x128xf32>
    %c0_5 = arith.constant 0 : index
    %c0_6 = arith.constant 0 : index
    %6 = vector.load %arg4[%c0_5, %c0_6] : memref<4x128xf32, #tpu.memory_space<vmem>>, vector<4x128xf32>
    tpu.vector_store %arg4[%c0_5, %c0_6], %5 {strides = array<i32>} : memref<4x128xf32, #tpu.memory_space<vmem>>, vector<4x128xf32>,
    return
  }
  func.func @transform_0(%arg0: i32) -> (i32, i32) {
    %c0_i32 = arith.constant 0 : i32
    %c0_i32_0 = arith.constant 0 : i32
    return %arg0, %c0_i32 : i32, i32
  }
  func.func @transform_1(%arg0: i32) -> (i32, i32) {
    %c0_i32 = arith.constant 0 : i32
    %c0_i32_0 = arith.constant 0 : i32
    %c0_i32_1 = arith.constant 0 : i32
    return %c0_i32, %c0_i32_0 : i32, i32
  }
  func.func @transform_2(%arg0: i32) -> (i32, i32) {
    %c0_i32 = arith.constant 0 : i32
    %c0_i32_0 = arith.constant 0 : i32
    %c0_i32_1 = arith.constant 0 : i32
    return %c0_i32, %c0_i32_0 : i32, i32
  }
  func.func @transform_3(%arg0: i32) -> (i32, i32) {
    %c0_i32 = arith.constant 0 : i32
    %c0_i32_0 = arith.constant 0 : i32
    return %arg0, %c0_i32 : i32, i32
  }
}

</mosaic_0001>

<llo_original>
// kernel: tpu_custom_call.1
$region0: #{tpu_custom_call.1}
  #allocation0 [shape = 'u32[]', space=smem, size = 0x4, offset = 0x4, fixed_abs, tag = 'smem constant byte address 0x4 - core index']
  #allocation1 [shape = 'u32[144,128]{1,0:T(1,128)}', space=vmem, size = 0x12000, scoped, tag = 'internal scratch']
  %s0 = inlined_call_operand.hbm [shape: f32[4,256], index: 0, kind: input, shape index: {}]
  %s1 = inlined_call_operand.hbm [shape: f32[256,128], index: 1, kind: input, shape index: {}]
  %s2 = inlined_call_operand.vmem [shape: f32[1,128], index: 2, kind: input, shape index: {}]
  %s3 = inlined_call_operand.hbm [shape: f32[4,128], index: 3, kind: output, shape index: {}]
  %s4 = sld [smem:[#allocation0]]
  $region30: #{tpu_custom_call.1} parent=0
    _
  %s6 = ssub.s32 1, %s4
  %s7 = scalar_select 0, %s6, %s4
  $region1: #{tpu_custom_call.1} parent=0
    #allocation2 [shape = 'u8[4096]{0}', space=vmem, size = 0x1000, scoped, tag = 'input window, operand 0, single buffered']
    #allocation3 [shape = 's32[1]{0}', space=sflag, size = 0x4, scoped, tag = 'scoped memory for tpu_custom_call.1']
    #allocation4 [shape = 's32[1]{0}', space=sflag, size = 0x4, scoped, tag = 'scoped memory for tpu_custom_call.1']
    #allocation5 [shape = 'u8[131072]{0}', space=vmem, size = 0x20000, scoped, tag = 'input window, operand 1, single buffered']
    #allocation6 [shape = 's32[1]{0}', space=sflag, size = 0x4, scoped, tag = 'scoped memory for tpu_custom_call.1']
    #allocation7 [shape = 'u8[2048]{0}', space=vmem, size = 0x800, scoped, tag = 'output window, operand 0, single buffered']
    %8 = vsyncpa [#allocation3], 0
    %9 = vsyncpa [#allocation6], 0
    %10 = vsyncpa [#allocation4], 0
    // Predicated region
    $region2: #{tpu_custom_call.1} parent=1 // pred_check
      _
    $region3: #{tpu_custom_call.1} parent=1 // pred_check_branch
      %12 = sbr.rel (0) target = $region5
    $region4: #{tpu_custom_call.1} parent=1 // pred_region
      %s14 = ssub.s32 128, 128
      %15 = vsyncadd [#allocation3], %s14
      %s17 = sshll.u32 [#allocation2], 4
      %s18 = int_to_ptr.vmem [resolvable:$true] %s17
      %20 = dma.hbm_to_vmem [thread:$0]  %s0, 128, %s18, [#allocation3]
    $region5: #{tpu_custom_call.1} parent=1 // pred_fallthru
      _
    // Predicated region
    $region6: #{tpu_custom_call.1} parent=1 // pred_check
      _
    $region7: #{tpu_custom_call.1} parent=1 // pred_check_branch
      %22 = sbr.rel (0) target = $region9
    $region8: #{tpu_custom_call.1} parent=1 // pred_region
      %s24 = ssub.s32 4096, 4096
      %25 = vsyncadd [#allocation6], %s24
      %s26 = sshll.u32 [#allocation5], 4
      %s27 = int_to_ptr.vmem [resolvable:$true] %s26
      %32 = dma.hbm_to_vmem [thread:$0]  %s1, 4096, %s27, [#allocation6], 128, 128, 8
    $region9: #{tpu_custom_call.1} parent=1 // pred_fallthru
      _
    // Predicated region
    $region10: #{tpu_custom_call.1} parent=1 // pred_check
      _
    $region11: #{tpu_custom_call.1} parent=1 // pred_check_branch
      %34 = sbr.rel (0) target = $region13
    $region12: #{tpu_custom_call.1} parent=1 // pred_region
      _
    $region13: #{tpu_custom_call.1} parent=1 // pred_fallthru
      _
    // Predicated region
    $region14: #{tpu_custom_call.1} parent=1 // pred_check
      _
    $region15: #{tpu_custom_call.1} parent=1 // pred_check_branch
      %36 = sbr.rel (0) target = $region17
    $region16: #{tpu_custom_call.1} parent=1 // pred_region
      %37 = dma.done [#allocation3], 128
    $region17: #{tpu_custom_call.1} parent=1 // pred_fallthru
      _
    // Predicated region
    $region18: #{tpu_custom_call.1} parent=1 // pred_check
      _
    $region19: #{tpu_custom_call.1} parent=1 // pred_check_branch
      %39 = sbr.rel (0) target = $region21
    $region20: #{tpu_custom_call.1} parent=1 // pred_region
      %40 = dma.done [#allocation6], 4096
    $region21: #{tpu_custom_call.1} parent=1 // pred_fallthru
      _
    %v41 = vld [vmem:[#allocation2] sm:$0xff]
    %v42 = vld [vmem:[#allocation5] sm:$0xff]
    %v43 = vld [vmem:[#allocation5 + $0x8] sm:$0xff]
    %v44 = vld [vmem:[#allocation5 + $0x10] sm:$0xff]
    %v45 = vld [vmem:[#allocation5 + $0x18] sm:$0xff]
    %v46 = vld [vmem:[#allocation5 + $0x20] sm:$0xff]
    %v47 = vld [vmem:[#allocation5 + $0x28] sm:$0xff]
    %v48 = vld [vmem:[#allocation5 + $0x30] sm:$0xff]
    %v49 = vld [vmem:[#allocation5 + $0x38] sm:$0xff]
    %v50 = vld [vmem:[#allocation5 + $0x40] sm:$0xff]
    %v51 = vld [vmem:[#allocation5 + $0x48] sm:$0xff]
    %v52 = vld [vmem:[#allocation5 + $0x50] sm:$0xff]
    %v53 = vld [vmem:[#allocation5 + $0x58] sm:$0xff]
    %v54 = vld [vmem:[#allocation5 + $0x60] sm:$0xff]
    %v55 = vld [vmem:[#allocation5 + $0x68] sm:$0xff]
    %v56 = vld [vmem:[#allocation5 + $0x70] sm:$0xff]
    %v57 = vld [vmem:[#allocation5 + $0x78] sm:$0xff]
    %v58 = vld [vmem:[#allocation5 + $0x80] sm:$0xff]
    %v59 = vld [vmem:[#allocation5 + $0x88] sm:$0xff]
    %v60 = vld [vmem:[#allocation5 + $0x90] sm:$0xff]
    %v61 = vld [vmem:[#allocation5 + $0x98] sm:$0xff]
    %v62 = vld [vmem:[#allocation5 + $0xa0] sm:$0xff]
    %v63 = vld [vmem:[#allocation5 + $0xa8] sm:$0xff]
    %v64 = vld [vmem:[#allocation5 + $0xb0] sm:$0xff]
    %v65 = vld [vmem:[#allocation5 + $0xb8] sm:$0xff]
    %v66 = vld [vmem:[#allocation5 + $0xc0] sm:$0xff]
    %v67 = vld [vmem:[#allocation5 + $0xc8] sm:$0xff]
    %v68 = vld [vmem:[#allocation5 + $0xd0] sm:$0xff]
    %v69 = vld [vmem:[#allocation5 + $0xd8] sm:$0xff]
    %v70 = vld [vmem:[#allocation5 + $0xe0] sm:$0xff]
    %v71 = vld [vmem:[#allocation5 + $0xe8] sm:$0xff]
    %v72 = vld [vmem:[#allocation5 + $0xf0] sm:$0xff]
    %v73 = vld [vmem:[#allocation5 + $0xf8] sm:$0xff]
    %v74 = vld [vmem:[%s2] sm:$0x1]
    %v76 = vlaneseq
    %v77 = vshrl.u32 %v76, 7
    %v78 = vsub.s32 0, %v77
    %v79 = vrot.slane %v74, %v78
    %v82 = vcombine.high %v41, %v41
    %84 = vmatprep.subr.mxu0 0.0
    %85 = vmatpush1.msra.mxu0 %v57
    %86 = vmatprep.subr.mxu0 0.0
    %87 = vmatpush1.msra.mxu0 %v56
    %88 = vmatprep.subr.mxu0 0.0
    %89 = vmatpush1.msra.mxu0 %v55
    %90 = vmatprep.subr.mxu0 0.0
    %91 = vmatpush1.msra.mxu0 %v54
    %92 = vmatprep.subr.mxu0 0.0
    %93 = vmatpush1.msra.mxu0 %v53
    %94 = vmatprep.subr.mxu0 0.0
    %95 = vmatpush1.msra.mxu0 %v52
    %96 = vmatprep.subr.mxu0 0.0
    %97 = vmatpush1.msra.mxu0 %v51
    %98 = vmatprep.subr.mxu0 0.0
    %99 = vmatpush1.msra.mxu0 %v50
    %100 = vmatprep.subr.mxu0 0.0
    %101 = vmatpush1.msra.mxu0 %v49
    %102 = vmatprep.subr.mxu0 0.0
    %103 = vmatpush1.msra.mxu0 %v48
    %104 = vmatprep.subr.mxu0 0.0
    %105 = vmatpush1.msra.mxu0 %v47
    %106 = vmatprep.subr.mxu0 0.0
    %107 = vmatpush1.msra.mxu0 %v46
    %108 = vmatprep.subr.mxu0 0.0
    %109 = vmatpush1.msra.mxu0 %v45
    %110 = vmatprep.subr.mxu0 0.0
    %111 = vmatpush1.msra.mxu0 %v44
    %112 = vmatprep.subr.mxu0 0.0
    %113 = vmatpush1.msra.mxu0 %v43
    %114 = vmatprep.subr.mxu0 0.0
    %115 = vmatpush1.msra.mxu0 %v42
    %116 = vmatprep.subr.mxu0 0.0
    %117 = vmatpush2.msra.mxu0 %v73
    %118 = vmatprep.subr.mxu0 0.0
    %119 = vmatpush2.msra.mxu0 %v72
    %120 = vmatprep.subr.mxu0 0.0
    %121 = vmatpush2.msra.mxu0 %v71
    %122 = vmatprep.subr.mxu0 0.0
    %123 = vmatpush2.msra.mxu0 %v70
    %124 = vmatprep.subr.mxu0 0.0
    %125 = vmatpush2.msra.mxu0 %v69
    %126 = vmatprep.subr.mxu0 0.0
    %127 = vmatpush2.msra.mxu0 %v68
    %128 = vmatprep.subr.mxu0 0.0
    %129 = vmatpush2.msra.mxu0 %v67
    %130 = vmatprep.subr.mxu0 0.0
    %131 = vmatpush2.msra.mxu0 %v66
    %132 = vmatprep.subr.mxu0 0.0
    %133 = vmatpush2.msra.mxu0 %v65
    %134 = vmatprep.subr.mxu0 0.0
    %135 = vmatpush2.msra.mxu0 %v64
    %136 = vmatprep.subr.mxu0 0.0
    %137 = vmatpush2.msra.mxu0 %v63
    %138 = vmatprep.subr.mxu0 0.0
    %139 = vmatpush2.msra.mxu0 %v62
    %140 = vmatprep.subr.mxu0 0.0
    %141 = vmatpush2.msra.mxu0 %v61
    %142 = vmatprep.subr.mxu0 0.0
    %143 = vmatpush2.msra.mxu0 %v60
    %144 = vmatprep.subr.mxu0 0.0
    %145 = vmatpush2.msra.mxu0 %v59
    %146 = vmatprep.subr.mxu0 0.0
    %147 = vmatpush2.msra.mxu0 %v58
    %148 = vmatprep.mubr.f32.mxu0 %v82
    %149 = vmatmul.mubr.f32.gmra.mxu0 %v41
    %v150 = vpop.f32.mrf.mxu0
    %v151 = vadd.f32 %v79, %v150
    %v152 = vpop.f32.mrf.mxu0
    %153 = vdwg.mxu0
    %154 = vst [vmem:[#allocation7] sm:$0xf] %v151
    // Predicated region
    $region22: #{tpu_custom_call.1} parent=1 // pred_check
      _
    $region23: #{tpu_custom_call.1} parent=1 // pred_check_branch
      %156 = sbr.rel (0) target = $region25
    $region24: #{tpu_custom_call.1} parent=1 // pred_region
      %s158 = ssub.s32 64, 64
      %159 = vsyncadd [#allocation4], %s158
      %s161 = sshll.u32 [#allocation7], 4
      %s162 = int_to_ptr.vmem [resolvable:$true] %s161
      %164 = dma.vmem_to_hbm [thread:$0]  %s162, 64, %s3, [#allocation4]
    $region25: #{tpu_custom_call.1} parent=1 // pred_fallthru
      _
    // Predicated region
    $region26: #{tpu_custom_call.1} parent=1 // pred_check
      _
    $region27: #{tpu_custom_call.1} parent=1 // pred_check_branch
      %166 = sbr.rel (0) target = $region29
    $region28: #{tpu_custom_call.1} parent=1 // pred_region
      %167 = dma.done [#allocation4], 64
    $region29: #{tpu_custom_call.1} parent=1 // pred_fallthru
      _
    %168 = vsyncpa [#allocation3], 1
    %169 = vsyncpa [#allocation6], 1
    %170 = vsyncpa [#allocation4], 1

</llo_original>
